<compile_context>
chip_gen: v6e
topology: v6e:2x2x1
jax: 0.10.0
libtpu: 0.0.40
codegen_flags: <defaults>
</compile_context>

<pallas_src>
import functools

import jax
import jax.numpy as jnp
from jax import lax
from jax.experimental import pallas as pl
from jax.experimental.pallas import tpu as pltpu

_EPS2 = 1e-16  # (F.cosine_similarity eps = 1e-8) squared, applied per squared-norm


def ge2e_kernel(w_ref, b_ref, cent_ref, emb_ref, loss_ref, *, use_bf16_matmul):
    """One speaker-tile of the GE2E forward.

    cent_ref : (N, D)       f32  L2-normalized centroids of ALL speakers (same block each step)
    emb_ref  : (TS, M, D)   any  embeddings of this tile's TS speakers
    loss_ref : (1, 8, 128)  f32  per-tile partial loss (scalar broadcast over the block)
    """
    TS, M, D = emb_ref.shape
    N = cent_ref.shape[0]
    F = TS * M                                   # frames in this tile

    w = w_ref[0, 0]
    b = b_ref[0, 0]
    c = w * 1e-6 + b                             # fold +1e-6 into the bias (exact)

    tile_off = pl.program_id(0) * TS             # global speaker index of this tile's first row

    # Per-frame L2-normalized embeddings: f32 elementwise, EUP rsqrt (no sqrt/divide).
    emb = emb_ref[...].astype(jnp.float32)                                   # (TS, M, D) tile
    emb_flat = emb.reshape(F, D)                                             # layout-safe collapse
    inv_emb = lax.rsqrt(jnp.maximum(
        jnp.sum(emb_flat * emb_flat, axis=-1, keepdims=True), _EPS2))        # (F, 1)
    n_emb = emb_flat * inv_emb                                               # (F, D)

    n_cent = cent_ref[...]                                                   # (N, D), normalized

    mxu_dtype = jnp.bfloat16 if use_bf16_matmul else jnp.float32
    # cos_diff in lane-dense transposed layout: cos_diff_t[k, f] = cos(emb[f], centroid[k]).
    cos_diff_t = lax.dot_general(
        n_cent.astype(mxu_dtype), n_emb.astype(mxu_dtype),
        dimension_numbers=(((1,), (1,)), ((), ())),
        preferred_element_type=jnp.float32)                                  # (N, F)

    # Diagonal mask diag[k, f] = (tile_off + f // M == k), from two tiny iotas.
    lane = lax.broadcasted_iota(jnp.int32, (1, F), 1)                        # (1, F)
    crow = lax.broadcasted_iota(jnp.int32, (N, 1), 0)                        # (N, 1)
    off = lane - (crow - tile_off) * M                                       # (N, F)
    diag = jnp.logical_and(off >= 0, off < M)                                # (N, F) bool

    if M > 1:
        # Leave-one-out centroids: (sum - e); the 1/(M-1) cancels under normalization.
        sum_e = jnp.sum(emb, axis=1, keepdims=True)                          # (TS, 1, D)
        utt = (sum_e - emb).reshape(F, D)                                    # (F, D)
        inv_utt = lax.rsqrt(jnp.maximum(
            jnp.sum(utt * utt, axis=-1, keepdims=True), _EPS2))              # (F, 1)
        prod = n_emb * (utt * inv_utt)                                       # (F, D)
        # Row-sum over D delivered directly lane-major as (1, F) via a ones-vector matmul
        # (avoids a sublane->lane relayout of a (TS, M) array).
        ones_row = jnp.ones((1, D), jnp.float32)
        cos_same_row = lax.dot_general(
            ones_row, prod,
            dimension_numbers=(((1,), (1,)), ((), ())),
            preferred_element_type=jnp.float32)                              # (1, F)
        cossim_t = jnp.where(diag, cos_same_row, cos_diff_t)
        pos_row = w * cos_same_row + c                                       # = sim diagonal
    else:
        cossim_t = cos_diff_t
        pos_row = None

    sim_t = w * cossim_t + c                                                 # (N, F)

    # neg[f] = log(sum_k exp(sim[k, f]) + 1e-6): reduce over the centroid (sublane) axis.
    neg_row = jnp.log(jnp.sum(jnp.exp(sim_t), axis=0, keepdims=True) + 1e-6)  # (1, F)

    if pos_row is None:  # M == 1: diagonal select (reference skips the cos_same replacement)
        pos_row = jnp.sum(jnp.where(diag, sim_t, 0.0), axis=0, keepdims=True)

    partial = jnp.sum(neg_row - pos_row)
    loss_ref[...] = jnp.full(loss_ref.shape, partial, dtype=jnp.float32)


def _largest_divisor_at_most(n, cap):
    cap = int(max(1, min(n, cap)))
    for t in range(cap, 0, -1):
        if n % t == 0:
            return t
    return 1


def _vmem_capacity_bytes():
    try:
        return int(pltpu.get_tpu_info().vmem_capacity_bytes)
    except Exception:
        return 64 << 20  # conservative (v7x per-TC) fallback


def ge2e_loss(embeddings, w=10.0, b=-5.0, *, tile_speakers=None, use_bf16_matmul=False):
    # Note: torch.clamp(self.w, 1e-6) in the reference discards its result -> no-op.
    N, M, D = embeddings.shape

    # Normalized speaker centroids (tiny (N, D)) in plain XLA so the kernel can tile the
    # speaker axis.  The 1/M of the mean cancels exactly under L2 normalization.
    cent = jnp.sum(embeddings.astype(jnp.float32), axis=1)                   # (N, D)
    inv_c = lax.rsqrt(jnp.maximum(jnp.sum(cent * cent, axis=-1, keepdims=True), _EPS2))
    n_cent = cent * inv_c                                                    # (N, D) f32

    # Speaker-tile size: largest divisor of N keeping the per-step f32 live set ~<= 8 MiB
    # (so the embedding DMA pipelines and the (N, TS*M) intermediates stay small).
    if tile_speakers is None:
        budget = 8 << 20
        per_speaker = 4 * M * (6 * D + 5 * N) + 1
        tile_speakers = _largest_divisor_at_most(N, budget // per_speaker)
    TS = int(tile_speakers)
    assert N % TS == 0, "tile_speakers must divide the number of speakers"
    G = N // TS

    w_arr = jnp.full((1, 1), w, dtype=jnp.float32)
    b_arr = jnp.full((1, 1), b, dtype=jnp.float32)

    itemsize = jnp.dtype(embeddings.dtype).itemsize
    # Per-step VMEM: double-buffered centroid + embedding blocks, plus f32 intermediates.
    vmem_needed = (2 * N * D * 4 + 2 * TS * M * D * itemsize
                   + 4 * (6 * TS * M * D + 5 * N * TS * M) + (2 << 20))
    cap = _vmem_capacity_bytes()
    vmem_limit = int(min(max(vmem_needed, 16 << 20), cap - (8 << 20)))

    flops = (2 * N * (N * M) * D          # cos_diff matmul
             + 2 * (N * M) * D            # cos_same ones-matmul
             + 10 * N * M * D             # normalization / leave-one-out elementwise
             + 8 * N * (N * M))           # sim / softmax-sum elementwise
    transcendentals = N * (N * M) + 4 * N * M
    bytes_accessed = int(embeddings.size) * itemsize + G * N * D * 4 + G * 8 * 128 * 4 + 16

    kernel = functools.partial(ge2e_kernel, use_bf16_matmul=use_bf16_matmul)

    partials = pl.pallas_call(
        kernel,
        out_shape=jax.ShapeDtypeStruct((G, 8, 128), jnp.float32),
        grid=(G,),
        in_specs=[
            pl.BlockSpec(memory_space=pltpu.MemorySpace.SMEM),               # w
            pl.BlockSpec(memory_space=pltpu.MemorySpace.SMEM),               # b
            pl.BlockSpec((N, D), lambda i: (0, 0)),                          # normalized centroids
            pl.BlockSpec((TS, M, D), lambda i: (i, 0, 0)),                   # embedding tile
        ],
        out_specs=pl.BlockSpec((1, 8, 128), lambda i: (i, 0, 0)),            # per-tile partial loss
        compiler_params=pltpu.CompilerParams(
            dimension_semantics=("parallel",),                               # 2 TCs on v7x
            vmem_limit_bytes=vmem_limit),
        cost_estimate=pl.CostEstimate(
            flops=int(flops), transcendentals=int(transcendentals),
            bytes_accessed=int(bytes_accessed)),
    )(w_arr, b_arr, n_cent, embeddings)

    return jnp.sum(partials[:, 0, 0])


def ge2e_loss_ref(embeddings, w=10.0, b=-5.0):
    # Pure-JAX reference mirroring the PyTorch semantics (full f32, for a sanity check).
    emb = embeddings.astype(jnp.float32)
    N, M, D = emb.shape
    eps = 1e-8
    centroids = emb.mean(axis=1)
    sum_e = emb.sum(axis=1, keepdims=True)

    def cos(a, b_):
        na = jnp.maximum(jnp.linalg.norm(a, axis=-1), eps)
        nb = jnp.maximum(jnp.linalg.norm(b_, axis=-1), eps)
        return jnp.sum(a * b_, axis=-1) / (na * nb)

    cos_diff = cos(emb[:, :, None, :], centroids[None, None, :, :])          # (N, M, N)
    if M > 1:
        utt_c = (sum_e - emb) / (M - 1)
        cos_same = cos(emb, utt_c)                                           # (N, M)
        idx = jnp.arange(N)
        diag = idx[:, None, None] == idx[None, None, :]
        cos_diff = jnp.where(diag, cos_same[:, :, None], cos_diff)
    cos_diff = cos_diff + 1e-6
    sim = w * cos_diff + b
    pos = sim[jnp.arange(N), :, jnp.arange(N)]
    neg = jnp.log(jnp.exp(sim).sum(axis=2) + 1e-6)
    return jnp.sum(neg - pos)


if __name__ == "__main__":
    N_SPEAKERS, M_UTTERANCES, D_EMB = 4, 8, 32
    key = jax.random.PRNGKey(0)
    embeddings = jax.random.normal(key, (N_SPEAKERS, M_UTTERANCES, D_EMB), dtype=jnp.float32)

    ref = jax.block_until_ready(ge2e_loss_ref(embeddings))

    # Default path (single speaker tile at this small size).
    loss = jax.block_until_ready(ge2e_loss(embeddings))
    assert jnp.allclose(loss, ref, rtol=1e-2, atol=5e-2), (loss, ref)

    # Force the multi-tile grid path (2 speaker tiles) to exercise tiling + partial-loss sum.
    loss_tiled = jax.block_until_ready(ge2e_loss(embeddings, tile_speakers=2))
    assert jnp.allclose(loss_tiled, ref, rtol=1e-2, atol=5e-2), (loss_tiled, ref)

    print("KERNEL_OK")
</pallas_src>

<mosaic_0001>
module attributes {stable_mosaic.version = 11 : i64} {
  func.func @ge2e_kernel(%arg0: i32, %arg1: memref<1x1xf32, #tpu.memory_space<smem>>, %arg2: memref<1x1xf32, #tpu.memory_space<smem>>, %arg3: memref<4x32xf32, #tpu.memory_space<vmem>>, %arg4: memref<4x8x32xf32, #tpu.memory_space<vmem>>, %arg5: memref<1x8x128xf32, #tpu.memory_space<vmem>>) attributes {dimension_semantics = [#tpu.dimension_semantics<parallel>], iteration_bounds = array<i64: 1>, scalar_prefetch = 0 : i64, scratch_operands = 0 : i64, tpu.core_type = #tpu.core_type<tc>, window_params = [{transform_indices = @transform_0, window_bounds = array<i64: 1, 1>}, {transform_indices = @transform_1, window_bounds = array<i64: 1, 1>}, {pipeline_mode = #tpu.pipeline_mode<synchronous>, transform_indices = @transform_2, window_bounds = array<i64: 4, 32>}, {transform_indices = @transform_3, window_bounds = array<i64: 4, 8, 32>}, {transform_indices = @transform_4, window_bounds = array<i64: 1, 8, 128>}]} {
    %c0 = arith.constant 0 : index
    %c0_0 = arith.constant 0 : index
    %0 = memref.load %arg1[%c0, %c0_0] : memref<1x1xf32, #tpu.memory_space<smem>>
    %c0_1 = arith.constant 0 : index
    %c0_2 = arith.constant 0 : index
    %1 = memref.load %arg2[%c0_1, %c0_2] : memref<1x1xf32, #tpu.memory_space<smem>>
    %cst = arith.constant 9.99999997E-7 : f32
    %2 = arith.mulf %0, %cst : f32
    %3 = arith.addf %2, %1 : f32
    %c4_i32 = arith.constant 4 : i32
    %4 = arith.muli %arg0, %c4_i32 : i32
    %c0_3 = arith.constant 0 : index
    %c0_4 = arith.constant 0 : index
    %c0_5 = arith.constant 0 : index
    %5 = vector.load %arg4[%c0_3, %c0_4, %c0_5] : memref<4x8x32xf32, #tpu.memory_space<vmem>>, vector<4x8x32xf32>
    %6 = vector.shape_cast %5 : vector<4x8x32xf32> to vector<32x32xf32>
    %7 = arith.mulf %6, %6 : vector<32x32xf32>
    %cst_6 = arith.constant dense<0.000000e+00> : vector<32xf32>
    %8 = vector.multi_reduction <add>, %7, %cst_6 [1] : vector<32x32xf32> to vector<32xf32>
    %9 = vector.shape_cast %8 : vector<32xf32> to vector<32x1xf32>
    %cst_7 = arith.constant 1.000000e-16 : f32
    %10 = vector.broadcast %cst_7 : f32 to vector<32x1xf32>
    %11 = arith.maximumf %9, %10 : vector<32x1xf32>
    %12 = math.rsqrt %11 : vector<32x1xf32>
    %13 = vector.broadcast %12 : vector<32x1xf32> to vector<32x32xf32>
    %14 = arith.mulf %6, %13 : vector<32x32xf32>
    %c0_8 = arith.constant 0 : index
    %c0_9 = arith.constant 0 : index
    %15 = vector.load %arg3[%c0_8, %c0_9] : memref<4x32xf32, #tpu.memory_space<vmem>>, vector<4x32xf32>
    %cst_10 = arith.constant dense<0.000000e+00> : vector<4x32xf32>
    %16 = tpu.matmul %15, %14, %cst_10 {dimension_numbers = #tpu.dot_dimension_numbers<[1], [1], [0], [0], [0, 0, 1, 0], [], []>} : vector<4x32xf32>, vector<32x32xf32>, vector<4x32xf32> -> vector<4x32xf32>
    %17 = tpu.iota {dimensions = array<i32: 1>} : vector<1x32xi32>
    %18 = tpu.iota {dimensions = array<i32: 0>} : vector<4x1xi32>
    %19 = vector.broadcast %4 : i32 to vector<4x1xi32>
    %20 = arith.subi %18, %19 : vector<4x1xi32>
    %c8_i32 = arith.constant 8 : i32
    %21 = vector.broadcast %c8_i32 : i32 to vector<4x1xi32>
    %22 = arith.muli %20, %21 : vector<4x1xi32>
    %23 = vector.broadcast %17 : vector<1x32xi32> to vector<4x32xi32>
    %24 = vector.broadcast %22 : vector<4x1xi32> to vector<4x32xi32>
    %25 = arith.subi %23, %24 : vector<4x32xi32>
    %c0_i32 = arith.constant 0 : i32
    %26 = vector.broadcast %c0_i32 : i32 to vector<4x32xi32>
    %27 = arith.cmpi sge, %25, %26 : vector<4x32xi32>
    %c8_i32_11 = arith.constant 8 : i32
    %28 = vector.broadcast %c8_i32_11 : i32 to vector<4x32xi32>
    %29 = arith.cmpi slt, %25, %28 : vector<4x32xi32>
    %30 = arith.andi %27, %29 : vector<4x32xi1>
    %cst_12 = arith.constant dense<0.000000e+00> : vector<4x32xf32>
    %31 = vector.multi_reduction <add>, %5, %cst_12 [1] : vector<4x8x32xf32> to vector<4x32xf32>
    %32 = vector.shape_cast %31 : vector<4x32xf32> to vector<4x1x32xf32>
    %33 = vector.broadcast %32 : vector<4x1x32xf32> to vector<4x8x32xf32>
    %34 = arith.subf %33, %5 : vector<4x8x32xf32>
    %35 = vector.shape_cast %34 : vector<4x8x32xf32> to vector<32x32xf32>
    %36 = arith.mulf %35, %35 : vector<32x32xf32>
    %cst_13 = arith.constant dense<0.000000e+00> : vector<32xf32>
    %37 = vector.multi_reduction <add>, %36, %cst_13 [1] : vector<32x32xf32> to vector<32xf32>
    %38 = vector.shape_cast %37 : vector<32xf32> to vector<32x1xf32>
    %cst_14 = arith.constant 1.000000e-16 : f32
    %39 = vector.broadcast %cst_14 : f32 to vector<32x1xf32>
    %40 = arith.maximumf %38, %39 : vector<32x1xf32>
    %41 = math.rsqrt %40 : vector<32x1xf32>
    %42 = vector.broadcast %41 : vector<32x1xf32> to vector<32x32xf32>
    %43 = arith.mulf %35, %42 : vector<32x32xf32>
    %44 = arith.mulf %14, %43 : vector<32x32xf32>
    %cst_15 = arith.constant 1.000000e+00 : f32
    %45 = vector.broadcast %cst_15 : f32 to vector<1x32xf32>
    %cst_16 = arith.constant dense<0.000000e+00> : vector<1x32xf32>
    %46 = tpu.matmul %45, %44, %cst_16 {dimension_numbers = #tpu.dot_dimension_numbers<[1], [1], [0], [0], [0, 0, 1, 0], [], []>} : vector<1x32xf32>, vector<32x32xf32>, vector<1x32xf32> -> vector<1x32xf32>
    %47 = vector.shape_cast %46 : vector<1x32xf32> to vector<1x32xf32>
    %48 = vector.broadcast %47 : vector<1x32xf32> to vector<4x32xf32>
    %49 = arith.select %30, %48, %16 : vector<4x32xi1>, vector<4x32xf32>
    %50 = vector.broadcast %0 : f32 to vector<1x32xf32>
    %51 = arith.mulf %50, %46 : vector<1x32xf32>
    %52 = vector.broadcast %3 : f32 to vector<1x32xf32>
    %53 = arith.addf %51, %52 : vector<1x32xf32>
    %54 = vector.broadcast %0 : f32 to vector<4x32xf32>
    %55 = arith.mulf %54, %49 : vector<4x32xf32>
    %56 = vector.broadcast %3 : f32 to vector<4x32xf32>
    %57 = arith.addf %55, %56 : vector<4x32xf32>
    %58 = math.exp %57 : vector<4x32xf32>
    %cst_17 = arith.constant dense<0.000000e+00> : vector<32xf32>
    %59 = vector.multi_reduction <add>, %58, %cst_17 [0] : vector<4x32xf32> to vector<32xf32>
    %60 = vector.shape_cast %59 : vector<32xf32> to vector<1x32xf32>
    %cst_18 = arith.constant 9.99999997E-7 : f32
    %61 = vector.broadcast %cst_18 : f32 to vector<1x32xf32>
    %62 = arith.addf %60, %61 : vector<1x32xf32>
    %63 = math.log %62 : vector<1x32xf32>
    %64 = arith.subf %63, %53 : vector<1x32xf32>
    %65 = vector.shape_cast %64 : vector<1x32xf32> to vector<1x1x32xf32>
    %cst_19 = arith.constant dense<0.000000e+00> : vector<1xf32>
    %66 = vector.multi_reduction <add>, %65, %cst_19 [1, 2] : vector<1x1x32xf32> to vector<1xf32>
    %67 = vector.shape_cast %66 : vector<1xf32> to vector<1x1x1xf32>
    %68 = vector.extract %67[0, 0, 0] : f32 from vector<1x1x1xf32>
    %69 = vector.broadcast %68 : f32 to vector<1x8x128xf32>
    %c0_20 = arith.constant 0 : index
    %c0_21 = arith.constant 0 : index
    %c0_22 = arith.constant 0 : index
    %70 = vector.load %arg5[%c0_20, %c0_21, %c0_22] : memref<1x8x128xf32, #tpu.memory_space<vmem>>, vector<1x8x128xf32>
    tpu.vector_store %arg5[%c0_20, %c0_21, %c0_22], %69 {strides = array<i32>} : memref<1x8x128xf32, #tpu.memory_space<vmem>>, vector<1x8x128xf32>,
    return
  }
  func.func @transform_0(%arg0: i32) -> (i32, i32) {
    %c0_i32 = arith.constant 0 : i32
    %c0_i32_0 = arith.constant 0 : i32
    %c0_i32_1 = arith.constant 0 : i32
    return %c0_i32, %c0_i32_0 : i32, i32
  }
  func.func @transform_1(%arg0: i32) -> (i32, i32) {
    %c0_i32 = arith.constant 0 : i32
    %c0_i32_0 = arith.constant 0 : i32
    %c0_i32_1 = arith.constant 0 : i32
    return %c0_i32, %c0_i32_0 : i32, i32
  }
  func.func @transform_2(%arg0: i32) -> (i32, i32) {
    %c0_i32 = arith.constant 0 : i32
    %c0_i32_0 = arith.constant 0 : i32
    %c0_i32_1 = arith.constant 0 : i32
    return %c0_i32, %c0_i32_0 : i32, i32
  }
  func.func @transform_3(%arg0: i32) -> (i32, i32, i32) {
    %c0_i32 = arith.constant 0 : i32
    %c0_i32_0 = arith.constant 0 : i32
    %c0_i32_1 = arith.constant 0 : i32
    return %arg0, %c0_i32, %c0_i32_0 : i32, i32, i32
  }
  func.func @transform_4(%arg0: i32) -> (i32, i32, i32) {
    %c0_i32 = arith.constant 0 : i32
    %c0_i32_0 = arith.constant 0 : i32
    %c0_i32_1 = arith.constant 0 : i32
    return %arg0, %c0_i32, %c0_i32_0 : i32, i32, i32
  }
}

</mosaic_0001>

<llo_original>
// kernel: tpu_custom_call.1
$region0: #{tpu_custom_call.1}
  #allocation0 [shape = 'u32[]', space=smem, size = 0x4, offset = 0x4, fixed_abs, tag = 'smem constant byte address 0x4 - core index']
  #allocation1 [shape = 'u32[144,128]{1,0:T(1,128)}', space=vmem, size = 0x12000, scoped, tag = 'internal scratch']
  #allocation2 [shape = 'f32[1,1]{1,0:T(1,128)S(6)}', space=smem, size = 0x200, scoped, tag = 'scoped memory for tpu_custom_call.1']
  #allocation3 [shape = 'f32[1,1]{1,0:T(1,128)S(6)}', space=smem, size = 0x200, scoped, tag = 'scoped memory for tpu_custom_call.1']
  %s0 = inlined_call_operand.<no memory space> [shape: f32[1,1], index: 0, kind: input, shape index: {}]
  %s1 = inlined_call_operand.<no memory space> [shape: f32[1,1], index: 1, kind: input, shape index: {}]
  %s2 = inlined_call_operand.vmem [shape: f32[4,32], index: 2, kind: input, shape index: {}]
  %s3 = inlined_call_operand.hbm [shape: f32[4,8,32], index: 3, kind: input, shape index: {}]
  %s4 = inlined_call_operand.hbm [shape: f32[1,8,128], index: 4, kind: output, shape index: {}]
  %s5 = sld [smem:[#allocation0]]
  $region30: #{tpu_custom_call.1} parent=0
    _
  %s7 = ssub.s32 1, %s5
  %s8 = scalar_select 0, %s7, %s5
  %9 = sst [smem:[#allocation2]] %s0
  %10 = sst [smem:[#allocation3]] %s1
  $region1: #{tpu_custom_call.1} parent=0
    #allocation4 [shape = 'u8[16384]{0}', space=vmem, size = 0x4000, scoped, tag = 'input window, operand 3, single buffered']
    #allocation5 [shape = 's32[1]{0}', space=sflag, size = 0x4, scoped, tag = 'scoped memory for tpu_custom_call.1']
    #allocation6 [shape = 's32[1]{0}', space=sflag, size = 0x4, scoped, tag = 'scoped memory for tpu_custom_call.1']
    #allocation7 [shape = 'u8[4096]{0}', space=vmem, size = 0x1000, scoped, tag = 'output window, operand 0, single buffered']
    %11 = vsyncpa [#allocation5], 0
    %12 = vsyncpa [#allocation6], 0
    // Predicated region
    $region2: #{tpu_custom_call.1} parent=1 // pred_check
      _
    $region3: #{tpu_custom_call.1} parent=1 // pred_check_branch
      %14 = sbr.rel (0) target = $region5
    $region4: #{tpu_custom_call.1} parent=1 // pred_region
      _
    $region5: #{tpu_custom_call.1} parent=1 // pred_fallthru
      _
    // Predicated region
    $region6: #{tpu_custom_call.1} parent=1 // pred_check
      _
    $region7: #{tpu_custom_call.1} parent=1 // pred_check_branch
      %16 = sbr.rel (0) target = $region9
    $region8: #{tpu_custom_call.1} parent=1 // pred_region
      _
    $region9: #{tpu_custom_call.1} parent=1 // pred_fallthru
      _
    // Predicated region
    $region10: #{tpu_custom_call.1} parent=1 // pred_check
      _
    $region11: #{tpu_custom_call.1} parent=1 // pred_check_branch
      %18 = sbr.rel (0) target = $region13
    $region12: #{tpu_custom_call.1} parent=1 // pred_region
      _
    $region13: #{tpu_custom_call.1} parent=1 // pred_fallthru
      _
    // Predicated region
    $region14: #{tpu_custom_call.1} parent=1 // pred_check
      _
    $region15: #{tpu_custom_call.1} parent=1 // pred_check_branch
      %20 = sbr.rel (0) target = $region17
    $region16: #{tpu_custom_call.1} parent=1 // pred_region
      %s22 = ssub.s32 512, 512
      %23 = vsyncadd [#allocation5], %s22
      %s24 = sshll.u32 [#allocation4], 4
      %s25 = int_to_ptr.vmem [resolvable:$true] %s24
      %30 = dma.hbm_to_vmem [thread:$0]  %s3, 512, %s25, [#allocation5], 128, 128, 8
    $region17: #{tpu_custom_call.1} parent=1 // pred_fallthru
      _
    // Predicated region
    $region18: #{tpu_custom_call.1} parent=1 // pred_check
      _
    $region19: #{tpu_custom_call.1} parent=1 // pred_check_branch
      %32 = sbr.rel (0) target = $region21
    $region20: #{tpu_custom_call.1} parent=1 // pred_region
      %33 = dma.done [#allocation5], 512
    $region21: #{tpu_custom_call.1} parent=1 // pred_fallthru
      _
    %s34 = sld [smem:[#allocation2]]
    %s35 = sld [smem:[#allocation3]]
    %s36 = smul.f32 %s34, 1e-06
    %s37 = sadd.f32 %s36, %s35
    %s38 = smul.u32 0, 4
    %v39 = vld [vmem:[#allocation4] sm:$0xff]
    %v40 = vld [vmem:[#allocation4 + $0x8] sm:$0xff]
    %v41 = vld [vmem:[#allocation4 + $0x10] sm:$0xff]
    %v42 = vld [vmem:[#allocation4 + $0x18] sm:$0xff]
    %v43 = vmul.f32 %v39, %v39
    %v44 = vmul.f32 %v40, %v40
    %v45 = vmul.f32 %v41, %v41
    %v46 = vmul.f32 %v42, %v42
    %vm47 = vcmask 261120
    %v48 = vsel %vm47, %v43, 0.0
    %49 = vadd.xlane.f32.xlu0 %v48
    %v50 = vpop.xlane.xlu0 %49
    %v51 = vsel %vm47, %v44, 0.0
    %52 = vadd.xlane.f32.xlu0 %v51
    %v53 = vpop.xlane.xlu0 %52
    %v54 = vsel %vm47, %v45, 0.0
    %55 = vadd.xlane.f32.xlu0 %v54
    %v56 = vpop.xlane.xlu0 %55
    %v57 = vsel %vm47, %v46, 0.0
    %58 = vadd.xlane.f32.xlu0 %v57
    %v59 = vpop.xlane.xlu0 %58
    %v60 = vmax.f32 %v50, 1e-16
    %v61 = vmax.f32 %v53, 1e-16
    %v62 = vmax.f32 %v56, 1e-16
    %v63 = vmax.f32 %v59, 1e-16
    %v64 = vrsqrt.pop %v60
    %v65 = vrsqrt.pop %v61
    %v66 = vrsqrt.pop %v62
    %v67 = vrsqrt.pop %v63
    %v68 = vmul.f32 %v39, %v64
    %v69 = vmul.f32 %v40, %v65
    %v70 = vmul.f32 %v41, %v66
    %v71 = vmul.f32 %v42, %v67
    %v72 = vld [vmem:[%s2] sm:$0xf]
    %v74 = vsel %vm47, %v72, 0
    %v77 = vsel %vm47, %v68, 0
    %v80 = vsel %vm47, %v69, 0
    %v83 = vsel %vm47, %v70, 0
    %v86 = vsel %vm47, %v71, 0
    %88 = vmatprep.subr.mxu0 0.0
    %89 = vmatpush1.xpose.msra.mxu0 0.0
    %90 = vmatprep.subr.mxu0 0.0
    %91 = vmatpush1.xpose.msra.mxu0 0.0
    %92 = vmatprep.subr.mxu0 0.0
    %93 = vmatpush1.xpose.msra.mxu0 0.0
    %94 = vmatprep.subr.mxu0 0.0
    %95 = vmatpush1.xpose.msra.mxu0 0.0
    %96 = vmatprep.subr.mxu0 0.0
    %97 = vmatpush1.xpose.msra.mxu0 0.0
    %98 = vmatprep.subr.mxu0 0.0
    %99 = vmatpush1.xpose.msra.mxu0 0.0
    %100 = vmatprep.subr.mxu0 0.0
    %101 = vmatpush1.xpose.msra.mxu0 0.0
    %102 = vmatprep.subr.mxu0 0.0
    %103 = vmatpush1.xpose.msra.mxu0 0.0
    %104 = vmatprep.subr.mxu0 0.0
    %105 = vmatpush1.xpose.msra.mxu0 0.0
    %106 = vmatprep.subr.mxu0 0.0
    %107 = vmatpush1.xpose.msra.mxu0 0.0
    %108 = vmatprep.subr.mxu0 0.0
    %109 = vmatpush1.xpose.msra.mxu0 0.0
    %110 = vmatprep.subr.mxu0 0.0
    %111 = vmatpush1.xpose.msra.mxu0 0.0
    %112 = vmatprep.subr.mxu0 0.0
    %113 = vmatpush1.xpose.msra.mxu0 %v86
    %114 = vmatprep.subr.mxu0 0.0
    %115 = vmatpush1.xpose.msra.mxu0 %v83
    %116 = vmatprep.subr.mxu0 0.0
    %117 = vmatpush1.xpose.msra.mxu0 %v80
    %118 = vmatprep.subr.mxu0 0.0
    %119 = vmatpush1.xpose.msra.mxu0 %v77
    %120 = vmatprep.subr.mxu0 0.0
    %121 = vmatpush2.xpose.msra.mxu0 0.0
    %122 = vmatprep.subr.mxu0 0.0
    %123 = vmatpush2.xpose.msra.mxu0 0.0
    %124 = vmatprep.subr.mxu0 0.0
    %125 = vmatpush2.xpose.msra.mxu0 0.0
    %126 = vmatprep.subr.mxu0 0.0
    %127 = vmatpush2.xpose.msra.mxu0 0.0
    %128 = vmatprep.subr.mxu0 0.0
    %129 = vmatpush2.xpose.msra.mxu0 0.0
    %130 = vmatprep.subr.mxu0 0.0
    %131 = vmatpush2.xpose.msra.mxu0 0.0
    %132 = vmatprep.subr.mxu0 0.0
    %133 = vmatpush2.xpose.msra.mxu0 0.0
    %134 = vmatprep.subr.mxu0 0.0
    %135 = vmatpush2.xpose.msra.mxu0 0.0
    %136 = vmatprep.subr.mxu0 0.0
    %137 = vmatpush2.xpose.msra.mxu0 0.0
    %138 = vmatprep.subr.mxu0 0.0
    %139 = vmatpush2.xpose.msra.mxu0 0.0
    %140 = vmatprep.subr.mxu0 0.0
    %141 = vmatpush2.xpose.msra.mxu0 0.0
    %142 = vmatprep.subr.mxu0 0.0
    %143 = vmatpush2.xpose.msra.mxu0 0.0
    %144 = vmatprep.subr.mxu0 0.0
    %145 = vmatpush2.xpose.msra.mxu0 0.0
    %146 = vmatprep.subr.mxu0 0.0
    %147 = vmatpush2.xpose.msra.mxu0 0.0
    %148 = vmatprep.subr.mxu0 0.0
    %149 = vmatpush2.xpose.msra.mxu0 0.0
    %150 = vmatprep.subr.mxu0 0.0
    %151 = vmatpush2.xpose.msra.mxu0 0.0
    %152 = vmatprep.mubr.f32.mxu0 0.0
    %153 = vmatmul.mubr.f32.gmra.mxu0 %v74
    %v154 = vpop.f32.mrf.mxu0
    %v155 = vadd.f32 0.0, %v154
    %v156 = vpop.f32.mrf.mxu0
    %157 = vdwg.mxu0
    %v158 = vlaneseq
    %v159 = vand.u32 %v158, 127
    %v160 = vlaneseq
    %v161 = vshrl.u32 %v160, 7
    %v162 = vstv %s38
    %v163 = vsub.s32 %v161, %v162
    %v164 = vmul.u32 %v163, 8
    %v165 = vsub.s32 %v159, %v164
    %vm166 = vcmp.ge.s32.totalorder %v165, 0
    %vm167 = vcmp.lt.s32.totalorder %v165, 8
    %vm168 = vmand %vm166, %vm167
    %v169 = vsel %vm47, %v39, 0.0
    %v170 = vrot.slane %v169, 4
    %v171 = vadd.f32 %v169, %v170
    %v172 = vrot.slane %v171, 2
    %v173 = vadd.f32 %v171, %v172
    %v174 = vrot.slane %v173, 1
    %v175 = vadd.f32 %v173, %v174
    %v176 = vsel %vm47, %v40, 0.0
    %v177 = vrot.slane %v176, 4
    %v178 = vadd.f32 %v176, %v177
    %v179 = vrot.slane %v178, 2
    %v180 = vadd.f32 %v178, %v179
    %v181 = vrot.slane %v180, 1
    %v182 = vadd.f32 %v180, %v181
    %v183 = vsel %vm47, %v41, 0.0
    %v184 = vrot.slane %v183, 4
    %v185 = vadd.f32 %v183, %v184
    %v186 = vrot.slane %v185, 2
    %v187 = vadd.f32 %v185, %v186
    %v188 = vrot.slane %v187, 1
    %v189 = vadd.f32 %v187, %v188
    %v190 = vsel %vm47, %v42, 0.0
    %v191 = vrot.slane %v190, 4
    %v192 = vadd.f32 %v190, %v191
    %v193 = vrot.slane %v192, 2
    %v194 = vadd.f32 %v192, %v193
    %v195 = vrot.slane %v194, 1
    %v196 = vadd.f32 %v194, %v195
    %v197 = vsub.f32 %v175, %v39
    %v198 = vsub.f32 %v182, %v40
    %v199 = vsub.f32 %v189, %v41
    %v200 = vsub.f32 %v196, %v42
    %v201 = vmul.f32 %v197, %v197
    %v202 = vmul.f32 %v198, %v198
    %v203 = vmul.f32 %v199, %v199
    %v204 = vmul.f32 %v200, %v200
    %v205 = vsel %vm47, %v201, 0.0
    %206 = vadd.xlane.f32.xlu0 %v205
    %v207 = vpop.xlane.xlu0 %206
    %v208 = vsel %vm47, %v202, 0.0
    %209 = vadd.xlane.f32.xlu0 %v208
    %v210 = vpop.xlane.xlu0 %209
    %v211 = vsel %vm47, %v203, 0.0
    %212 = vadd.xlane.f32.xlu0 %v211
    %v213 = vpop.xlane.xlu0 %212
    %v214 = vsel %vm47, %v204, 0.0
    %215 = vadd.xlane.f32.xlu0 %v214
    %v216 = vpop.xlane.xlu0 %215
    %v217 = vmax.f32 %v207, 1e-16
    %v218 = vmax.f32 %v210, 1e-16
    %v219 = vmax.f32 %v213, 1e-16
    %v220 = vmax.f32 %v216, 1e-16
    %v221 = vrsqrt.pop %v217
    %v222 = vrsqrt.pop %v218
    %v223 = vrsqrt.pop %v219
    %v224 = vrsqrt.pop %v220
    %v225 = vmul.f32 %v197, %v221
    %v226 = vmul.f32 %v198, %v222
    %v227 = vmul.f32 %v199, %v223
    %v228 = vmul.f32 %v200, %v224
    %v229 = vmul.f32 %v68, %v225
    %v230 = vmul.f32 %v69, %v226
    %v231 = vmul.f32 %v70, %v227
    %v232 = vmul.f32 %v71, %v228
    %v234 = vsel %vm47, 1.0, 0
    %v237 = vsel %vm47, %v229, 0
    %v240 = vsel %vm47, %v230, 0
    %v243 = vsel %vm47, %v231, 0
    %v246 = vsel %vm47, %v232, 0
    %248 = vmatprep.subr.mxu0 0.0
    %249 = vmatpush1.xpose.msra.mxu0 0.0
    %250 = vmatprep.subr.mxu0 0.0
    %251 = vmatpush1.xpose.msra.mxu0 0.0
    %252 = vmatprep.subr.mxu0 0.0
    %253 = vmatpush1.xpose.msra.mxu0 0.0
    %254 = vmatprep.subr.mxu0 0.0
    %255 = vmatpush1.xpose.msra.mxu0 0.0
    %256 = vmatprep.subr.mxu0 0.0
    %257 = vmatpush1.xpose.msra.mxu0 0.0
    %258 = vmatprep.subr.mxu0 0.0
    %259 = vmatpush1.xpose.msra.mxu0 0.0
    %260 = vmatprep.subr.mxu0 0.0
    %261 = vmatpush1.xpose.msra.mxu0 0.0
    %262 = vmatprep.subr.mxu0 0.0
    %263 = vmatpush1.xpose.msra.mxu0 0.0
    %264 = vmatprep.subr.mxu0 0.0
    %265 = vmatpush1.xpose.msra.mxu0 0.0
    %266 = vmatprep.subr.mxu0 0.0
    %267 = vmatpush1.xpose.msra.mxu0 0.0
    %268 = vmatprep.subr.mxu0 0.0
    %269 = vmatpush1.xpose.msra.mxu0 0.0
    %270 = vmatprep.subr.mxu0 0.0
    %271 = vmatpush1.xpose.msra.mxu0 0.0
    %272 = vmatprep.subr.mxu0 0.0
    %273 = vmatpush1.xpose.msra.mxu0 %v246
    %274 = vmatprep.subr.mxu0 0.0
    %275 = vmatpush1.xpose.msra.mxu0 %v243
    %276 = vmatprep.subr.mxu0 0.0
    %277 = vmatpush1.xpose.msra.mxu0 %v240
    %278 = vmatprep.subr.mxu0 0.0
    %279 = vmatpush1.xpose.msra.mxu0 %v237
    %280 = vmatprep.subr.mxu0 0.0
    %281 = vmatpush2.xpose.msra.mxu0 0.0
    %282 = vmatprep.subr.mxu0 0.0
    %283 = vmatpush2.xpose.msra.mxu0 0.0
    %284 = vmatprep.subr.mxu0 0.0
    %285 = vmatpush2.xpose.msra.mxu0 0.0
    %286 = vmatprep.subr.mxu0 0.0
    %287 = vmatpush2.xpose.msra.mxu0 0.0
    %288 = vmatprep.subr.mxu0 0.0
    %289 = vmatpush2.xpose.msra.mxu0 0.0
    %290 = vmatprep.subr.mxu0 0.0
    %291 = vmatpush2.xpose.msra.mxu0 0.0
    %292 = vmatprep.subr.mxu0 0.0
    %293 = vmatpush2.xpose.msra.mxu0 0.0
    %294 = vmatprep.subr.mxu0 0.0
    %295 = vmatpush2.xpose.msra.mxu0 0.0
    %296 = vmatprep.subr.mxu0 0.0
    %297 = vmatpush2.xpose.msra.mxu0 0.0
    %298 = vmatprep.subr.mxu0 0.0
    %299 = vmatpush2.xpose.msra.mxu0 0.0
    %300 = vmatprep.subr.mxu0 0.0
    %301 = vmatpush2.xpose.msra.mxu0 0.0
    %302 = vmatprep.subr.mxu0 0.0
    %303 = vmatpush2.xpose.msra.mxu0 0.0
    %304 = vmatprep.subr.mxu0 0.0
    %305 = vmatpush2.xpose.msra.mxu0 0.0
    %306 = vmatprep.subr.mxu0 0.0
    %307 = vmatpush2.xpose.msra.mxu0 0.0
    %308 = vmatprep.subr.mxu0 0.0
    %309 = vmatpush2.xpose.msra.mxu0 0.0
    %310 = vmatprep.subr.mxu0 0.0
    %311 = vmatpush2.xpose.msra.mxu0 0.0
    %312 = vmatprep.mubr.f32.mxu0 0.0
    %313 = vmatmul.mubr.f32.gmra.mxu0 %v234
    %v314 = vpop.f32.mrf.mxu0
    %v315 = vadd.f32 0.0, %v314
    %v316 = vpop.f32.mrf.mxu0
    %317 = vdwg.mxu0
    %v318 = vlaneseq
    %v319 = vshrl.u32 %v318, 7
    %v320 = vsub.s32 0, %v319
    %v321 = vrot.slane %v315, %v320
    %v322 = vsel %vm168, %v321, %v155
    %v323 = vstv %s34
    %v324 = vmul.f32 %v323, %v315
    %v325 = vstv %s37
    %v326 = vadd.f32 %v324, %v325
    %v327 = vmul.f32 %v323, %v322
    %v328 = vadd.f32 %v327, %v325
    %v329 = vmul.f32 %v328, 1.442695
    %v330 = vpow.pop %v329
    %vm331 = vcmask 257024
    %v332 = vsel %vm331, %v330, 0.0
    %v333 = vrot.slane %v332, 4
    %v334 = vadd.f32 %v332, %v333
    %v335 = vrot.slane %v334, 2
    %v336 = vadd.f32 %v334, %v335
    %v337 = vrot.slane %v336, 1
    %v338 = vadd.f32 %v336, %v337
    %v339 = vadd.f32 %v338, 1e-06
    %v340 = vlog2.pop %v339
    %v341 = vmul.f32 %v340, 0.6931472
    %v342 = vsub.f32 %v341, %v326
    %vm343 = vcmask 253952
    %v344 = vsel %vm343, %v342, 0.0
    %345 = vadd.xlane.f32.xlu0 %v344
    %v346 = vpop.xlane.xlu0 %345
    %v347 = vrot.slane %v346, 4
    %v348 = vadd.f32 %v346, %v347
    %v349 = vrot.slane %v348, 2
    %v350 = vadd.f32 %v348, %v349
    %v351 = vrot.slane %v350, 1
    %v352 = vadd.f32 %v350, %v351
    %s353 = vtos %v352
    %v354 = vstv %s353
    %355 = vst [vmem:[#allocation7] sm:$0xff] %v354
    // Predicated region
    $region22: #{tpu_custom_call.1} parent=1 // pred_check
      _
    $region23: #{tpu_custom_call.1} parent=1 // pred_check_branch
      %357 = sbr.rel (0) target = $region25
    $region24: #{tpu_custom_call.1} parent=1 // pred_region
      %s359 = ssub.s32 128, 128
      %360 = vsyncadd [#allocation6], %s359
      %s362 = sshll.u32 [#allocation7], 4
      %s363 = int_to_ptr.vmem [resolvable:$true] %s362
      %365 = dma.vmem_to_hbm [thread:$0]  %s363, 128, %s4, [#allocation6]
    $region25: #{tpu_custom_call.1} parent=1 // pred_fallthru
      _
    // Predicated region
    $region26: #{tpu_custom_call.1} parent=1 // pred_check
      _
    $region27: #{tpu_custom_call.1} parent=1 // pred_check_branch
      %367 = sbr.rel (0) target = $region29
    $region28: #{tpu_custom_call.1} parent=1 // pred_region
      %368 = dma.done [#allocation6], 128
    $region29: #{tpu_custom_call.1} parent=1 // pred_fallthru
      _
    %369 = vsyncpa [#allocation5], 1
    %370 = vsyncpa [#allocation6], 1

</llo_original>
